<compile_context>
chip_gen: v6e
topology: v6e:2x2x1
jax: 0.10.0
libtpu: 0.0.40
codegen_flags: <defaults>
</compile_context>

<pallas_src>
import math
from functools import partial

import jax
import jax.numpy as jnp
from jax.experimental import pallas as pl
from jax.experimental.pallas import tpu as pltpu


PAD = 128        # lane-aligned padded feature width for hidden layers
N_LAYERS = 6


def mlp_kernel(x_ref, w_ref, b_ref, out_ref):
    """Fused 6-layer MLP on one (TB,) batch tile.

    x_ref  : (TB, 2)       raw 2-feature inputs (no lane padding)
    w_ref  : (6, 128, 128) zero-padded weight slab; layers 0..4 stored (in, out),
                           layer 5 (25 -> 1) stored transposed in row 0 of w_ref[5]
    b_ref  : (8, 128)      zero-padded bias slab, layer l at row l
    out_ref: (TB, 1)       final scalar output per row
    """
    x = x_ref[...]

    # Layer 1 (K=2): VPU formulation -- two broadcast FMAs instead of pushing
    # a near-empty (TB,2)x(2,128) tile through the MXU.
    h = (x[:, 0:1] * w_ref[0, 0:1, :]
         + x[:, 1:2] * w_ref[0, 1:2, :]
         + b_ref[0:1, :])
    h = jnp.maximum(h, 0.0)

    # Layers 2..5: full (TB,128) @ (128,128) MXU tiles + fused ReLU.
    for l in range(1, 5):
        h = jnp.dot(h, w_ref[l], preferred_element_type=jnp.float32) + b_ref[l:l + 1, :]
        h = jnp.maximum(h, 0.0)

    # Layer 6 (25 -> 1, no ReLU): VPU multiply + lane reduction instead of an
    # MXU matmul; weight row is lane-aligned, padded lanes are exactly zero.
    w6 = w_ref[5, 0:1, :]                                    # (1, 128)
    out = jnp.sum(h * w6, axis=-1, keepdims=True) + b_ref[5:6, 0:1]
    out_ref[...] = out.astype(out_ref.dtype)


def pack_params(params):
    """Pack per-layer (w:(in,out), b:(out,)) into padded slabs (do this ONCE).

    Returns:
      W: (6, 128, 128) float32, zero-padded. Layers 0..4 at W[l, :in, :out];
         layer 5 (25 -> 1) stored transposed at W[5, 0, :25].
      B: (8, 128)      float32, zero-padded (rows 6,7 unused), layer l at row l.
    """
    W = jnp.zeros((N_LAYERS, PAD, PAD), jnp.float32)
    B = jnp.zeros((8, PAD), jnp.float32)
    for l, (w, b) in enumerate(params):
        w = jnp.asarray(w, jnp.float32)
        b = jnp.asarray(b, jnp.float32).reshape(-1)
        if l == N_LAYERS - 1:
            W = W.at[l, 0, : w.shape[0]].set(w[:, 0])        # store transposed row
        else:
            W = W.at[l, : w.shape[0], : w.shape[1]].set(w)
        B = B.at[l, : b.shape[0]].set(b)
    return W, B


def _round_up(n, m):
    return ((n + m - 1) // m) * m


def _choose_tb(batch, batch_tile):
    """Pick a sublane-aligned batch tile; split >=2 ways when batch > ~1024
    so v7x's two TensorCores both get work via the 'parallel' grid axis."""
    batch_tile = max(8, _round_up(batch_tile, 8))
    if batch <= 1024:
        return max(8, _round_up(batch, 8))
    two_way = _round_up((batch + 1) // 2, 8)
    return min(batch_tile, two_way)


@partial(jax.jit, static_argnames=("batch_tile",))
def net_forward_packed(x, W, B, *, batch_tile=2048):
    """x: (B, 2) float32; W/B: packed slabs from pack_params. Returns (B, 1)."""
    Bsz = x.shape[0]
    x = x.astype(jnp.float32)

    tb = _choose_tb(Bsz, batch_tile)
    b_pad = _round_up(Bsz, tb)
    xp = x if b_pad == Bsz else jnp.pad(x, ((0, b_pad - Bsz), (0, 0)))

    out_padded = pl.pallas_call(
        mlp_kernel,
        out_shape=jax.ShapeDtypeStruct((b_pad, 1), jnp.float32),
        grid_spec=pltpu.PrefetchScalarGridSpec(
            num_scalar_prefetch=0,
            grid=(b_pad // tb,),
            in_specs=[
                pl.BlockSpec((tb, 2), lambda i: (i, 0)),                  # activations (narrow)
                pl.BlockSpec((N_LAYERS, PAD, PAD), lambda i: (0, 0, 0)),  # weights (resident)
                pl.BlockSpec((8, PAD), lambda i: (0, 0)),                 # biases  (resident)
            ],
            out_specs=pl.BlockSpec((tb, 1), lambda i: (i, 0)),            # narrow output
        ),
        compiler_params=pltpu.CompilerParams(
            dimension_semantics=("parallel",)),
    )(xp, W, B)

    return out_padded[:Bsz]


def net_forward(x, params, *, batch_tile=2048):
    """Convenience wrapper: packs params each call. Prefer packing once and
    calling net_forward_packed directly in hot loops."""
    W, B = pack_params(params)
    return net_forward_packed(x, W, B, batch_tile=batch_tile)


def init_params(key):
    """Deterministic init mimicking torch.nn.Linear default (U(+/- 1/sqrt(fan_in)))."""
    dims = [(2, 25), (25, 25), (25, 25), (25, 25), (25, 25), (25, 1)]
    params = []
    for (fan_in, fan_out) in dims:
        key, kw, kb = jax.random.split(key, 3)
        bound = 1.0 / math.sqrt(fan_in)
        w = jax.random.uniform(kw, (fan_in, fan_out), jnp.float32, -bound, bound)
        b = jax.random.uniform(kb, (fan_out,), jnp.float32, -bound, bound)
        params.append((w, b))
    return params


def reference_forward(x, params):
    h = x
    for i, (w, b) in enumerate(params):
        h = h @ w + b[None, :]
        if i < len(params) - 1:
            h = jnp.maximum(h, 0.0)
    return h


if __name__ == "__main__":
    key = jax.random.PRNGKey(0)
    key, kx1, kx2 = jax.random.split(key, 3)
    params = init_params(key)

    # Pack the tiny weights ONCE (hoisted out of the per-call path).
    W, B = pack_params(params)

    # Small case: single block, grid of size 1.
    batch = 8
    x = jax.random.normal(kx1, (batch, 2), jnp.float32)
    out = jax.block_until_ready(net_forward_packed(x, W, B))
    ref = reference_forward(x, params)
    assert out.shape == (batch, 1), out.shape
    assert jnp.allclose(out, ref, atol=2e-5, rtol=1e-5), (out, ref)

    # Larger, non-multiple batch: exercises the 2-way batch split + row padding.
    batch2 = 1995
    x2 = jax.random.normal(kx2, (batch2, 2), jnp.float32)
    out2 = jax.block_until_ready(net_forward_packed(x2, W, B))
    ref2 = reference_forward(x2, params)
    assert out2.shape == (batch2, 1), out2.shape
    assert jnp.allclose(out2, ref2, atol=2e-5, rtol=1e-5)

    print("KERNEL_OK")
</pallas_src>

<mosaic_0001>
module attributes {stable_mosaic.version = 11 : i64} {
  func.func @mlp_kernel(%arg0: i32, %arg1: memref<8x2xf32, #tpu.memory_space<vmem>>, %arg2: memref<6x128x128xf32, #tpu.memory_space<vmem>>, %arg3: memref<8x128xf32, #tpu.memory_space<vmem>>, %arg4: memref<8x1xf32, #tpu.memory_space<vmem>>) attributes {dimension_semantics = [#tpu.dimension_semantics<parallel>], iteration_bounds = array<i64: 1>, scalar_prefetch = 0 : i64, scratch_operands = 0 : i64, tpu.core_type = #tpu.core_type<tc>, window_params = [{transform_indices = @transform_0, window_bounds = array<i64: 8, 2>}, {pipeline_mode = #tpu.pipeline_mode<synchronous>, transform_indices = @transform_1, window_bounds = array<i64: 6, 128, 128>}, {pipeline_mode = #tpu.pipeline_mode<synchronous>, transform_indices = @transform_2, window_bounds = array<i64: 8, 128>}, {transform_indices = @transform_3, window_bounds = array<i64: 8, 1>}]} {
    %c0 = arith.constant 0 : index
    %c0_0 = arith.constant 0 : index
    %0 = vector.load %arg1[%c0, %c0_0] : memref<8x2xf32, #tpu.memory_space<vmem>>, vector<8x2xf32>
    %1 = vector.extract_strided_slice %0 {offsets = [0, 0], sizes = [8, 1], strides = [1, 1]} : vector<8x2xf32> to vector<8x1xf32>
    %c0_1 = arith.constant 0 : index
    %c0_2 = arith.constant 0 : index
    %c0_3 = arith.constant 0 : index
    %2 = vector.load %arg2[%c0_1, %c0_2, %c0_3] : memref<6x128x128xf32, #tpu.memory_space<vmem>>, vector<1x1x128xf32>
    %3 = vector.shape_cast %2 : vector<1x1x128xf32> to vector<1x128xf32>
    %4 = vector.broadcast %1 : vector<8x1xf32> to vector<8x128xf32>
    %5 = vector.broadcast %3 : vector<1x128xf32> to vector<8x128xf32>
    %6 = arith.mulf %4, %5 : vector<8x128xf32>
    %7 = vector.extract_strided_slice %0 {offsets = [0, 1], sizes = [8, 1], strides = [1, 1]} : vector<8x2xf32> to vector<8x1xf32>
    %c0_4 = arith.constant 0 : index
    %c1 = arith.constant 1 : index
    %c0_5 = arith.constant 0 : index
    %8 = vector.load %arg2[%c0_4, %c1, %c0_5] : memref<6x128x128xf32, #tpu.memory_space<vmem>>, vector<1x1x128xf32>
    %9 = vector.shape_cast %8 : vector<1x1x128xf32> to vector<1x128xf32>
    %10 = vector.broadcast %7 : vector<8x1xf32> to vector<8x128xf32>
    %11 = vector.broadcast %9 : vector<1x128xf32> to vector<8x128xf32>
    %12 = arith.mulf %10, %11 : vector<8x128xf32>
    %13 = arith.addf %6, %12 : vector<8x128xf32>
    %c0_6 = arith.constant 0 : index
    %c0_7 = arith.constant 0 : index
    %14 = vector.load %arg3[%c0_6, %c0_7] : memref<8x128xf32, #tpu.memory_space<vmem>>, vector<1x128xf32>
    %15 = vector.broadcast %14 : vector<1x128xf32> to vector<8x128xf32>
    %16 = arith.addf %13, %15 : vector<8x128xf32>
    %cst = arith.constant 0.000000e+00 : f32
    %17 = vector.broadcast %cst : f32 to vector<8x128xf32>
    %18 = arith.maximumf %16, %17 : vector<8x128xf32>
    %c1_8 = arith.constant 1 : index
    %c0_9 = arith.constant 0 : index
    %c0_10 = arith.constant 0 : index
    %19 = vector.load %arg2[%c1_8, %c0_9, %c0_10] : memref<6x128x128xf32, #tpu.memory_space<vmem>>, vector<1x128x128xf32>
    %20 = vector.shape_cast %19 : vector<1x128x128xf32> to vector<128x128xf32>
    %cst_11 = arith.constant dense<0.000000e+00> : vector<8x128xf32>
    %21 = tpu.matmul %18, %20, %cst_11 {dimension_numbers = #tpu.dot_dimension_numbers<[1], [0], [0], [1], [0, 0, 1, 1], [], []>} : vector<8x128xf32>, vector<128x128xf32>, vector<8x128xf32> -> vector<8x128xf32>
    %c1_12 = arith.constant 1 : index
    %c0_13 = arith.constant 0 : index
    %22 = vector.load %arg3[%c1_12, %c0_13] : memref<8x128xf32, #tpu.memory_space<vmem>>, vector<1x128xf32>
    %23 = vector.broadcast %22 : vector<1x128xf32> to vector<8x128xf32>
    %24 = arith.addf %21, %23 : vector<8x128xf32>
    %cst_14 = arith.constant 0.000000e+00 : f32
    %25 = vector.broadcast %cst_14 : f32 to vector<8x128xf32>
    %26 = arith.maximumf %24, %25 : vector<8x128xf32>
    %c2 = arith.constant 2 : index
    %c0_15 = arith.constant 0 : index
    %c0_16 = arith.constant 0 : index
    %27 = vector.load %arg2[%c2, %c0_15, %c0_16] : memref<6x128x128xf32, #tpu.memory_space<vmem>>, vector<1x128x128xf32>
    %28 = vector.shape_cast %27 : vector<1x128x128xf32> to vector<128x128xf32>
    %cst_17 = arith.constant dense<0.000000e+00> : vector<8x128xf32>
    %29 = tpu.matmul %26, %28, %cst_17 {dimension_numbers = #tpu.dot_dimension_numbers<[1], [0], [0], [1], [0, 0, 1, 1], [], []>} : vector<8x128xf32>, vector<128x128xf32>, vector<8x128xf32> -> vector<8x128xf32>
    %c2_18 = arith.constant 2 : index
    %c0_19 = arith.constant 0 : index
    %30 = vector.load %arg3[%c2_18, %c0_19] : memref<8x128xf32, #tpu.memory_space<vmem>>, vector<1x128xf32>
    %31 = vector.broadcast %30 : vector<1x128xf32> to vector<8x128xf32>
    %32 = arith.addf %29, %31 : vector<8x128xf32>
    %cst_20 = arith.constant 0.000000e+00 : f32
    %33 = vector.broadcast %cst_20 : f32 to vector<8x128xf32>
    %34 = arith.maximumf %32, %33 : vector<8x128xf32>
    %c3 = arith.constant 3 : index
    %c0_21 = arith.constant 0 : index
    %c0_22 = arith.constant 0 : index
    %35 = vector.load %arg2[%c3, %c0_21, %c0_22] : memref<6x128x128xf32, #tpu.memory_space<vmem>>, vector<1x128x128xf32>
    %36 = vector.shape_cast %35 : vector<1x128x128xf32> to vector<128x128xf32>
    %cst_23 = arith.constant dense<0.000000e+00> : vector<8x128xf32>
    %37 = tpu.matmul %34, %36, %cst_23 {dimension_numbers = #tpu.dot_dimension_numbers<[1], [0], [0], [1], [0, 0, 1, 1], [], []>} : vector<8x128xf32>, vector<128x128xf32>, vector<8x128xf32> -> vector<8x128xf32>
    %c3_24 = arith.constant 3 : index
    %c0_25 = arith.constant 0 : index
    %38 = vector.load %arg3[%c3_24, %c0_25] : memref<8x128xf32, #tpu.memory_space<vmem>>, vector<1x128xf32>
    %39 = vector.broadcast %38 : vector<1x128xf32> to vector<8x128xf32>
    %40 = arith.addf %37, %39 : vector<8x128xf32>
    %cst_26 = arith.constant 0.000000e+00 : f32
    %41 = vector.broadcast %cst_26 : f32 to vector<8x128xf32>
    %42 = arith.maximumf %40, %41 : vector<8x128xf32>
    %c4 = arith.constant 4 : index
    %c0_27 = arith.constant 0 : index
    %c0_28 = arith.constant 0 : index
    %43 = vector.load %arg2[%c4, %c0_27, %c0_28] : memref<6x128x128xf32, #tpu.memory_space<vmem>>, vector<1x128x128xf32>
    %44 = vector.shape_cast %43 : vector<1x128x128xf32> to vector<128x128xf32>
    %cst_29 = arith.constant dense<0.000000e+00> : vector<8x128xf32>
    %45 = tpu.matmul %42, %44, %cst_29 {dimension_numbers = #tpu.dot_dimension_numbers<[1], [0], [0], [1], [0, 0, 1, 1], [], []>} : vector<8x128xf32>, vector<128x128xf32>, vector<8x128xf32> -> vector<8x128xf32>
    %c4_30 = arith.constant 4 : index
    %c0_31 = arith.constant 0 : index
    %46 = vector.load %arg3[%c4_30, %c0_31] : memref<8x128xf32, #tpu.memory_space<vmem>>, vector<1x128xf32>
    %47 = vector.broadcast %46 : vector<1x128xf32> to vector<8x128xf32>
    %48 = arith.addf %45, %47 : vector<8x128xf32>
    %cst_32 = arith.constant 0.000000e+00 : f32
    %49 = vector.broadcast %cst_32 : f32 to vector<8x128xf32>
    %50 = arith.maximumf %48, %49 : vector<8x128xf32>
    %c5 = arith.constant 5 : index
    %c0_33 = arith.constant 0 : index
    %c0_34 = arith.constant 0 : index
    %51 = vector.load %arg2[%c5, %c0_33, %c0_34] : memref<6x128x128xf32, #tpu.memory_space<vmem>>, vector<1x1x128xf32>
    %52 = vector.shape_cast %51 : vector<1x1x128xf32> to vector<1x128xf32>
    %53 = vector.broadcast %52 : vector<1x128xf32> to vector<8x128xf32>
    %54 = arith.mulf %50, %53 : vector<8x128xf32>
    %cst_35 = arith.constant dense<0.000000e+00> : vector<8xf32>
    %55 = vector.multi_reduction <add>, %54, %cst_35 [1] : vector<8x128xf32> to vector<8xf32>
    %56 = vector.shape_cast %55 : vector<8xf32> to vector<8x1xf32>
    %c5_36 = arith.constant 5 : index
    %c0_37 = arith.constant 0 : index
    %57 = vector.load %arg3[%c5_36, %c0_37] : memref<8x128xf32, #tpu.memory_space<vmem>>, vector<1x1xf32>
    %58 = vector.broadcast %57 : vector<1x1xf32> to vector<8x1xf32>
    %59 = arith.addf %56, %58 : vector<8x1xf32>
    %c0_38 = arith.constant 0 : index
    %c0_39 = arith.constant 0 : index
    %60 = vector.load %arg4[%c0_38, %c0_39] : memref<8x1xf32, #tpu.memory_space<vmem>>, vector<8x1xf32>
    tpu.vector_store %arg4[%c0_38, %c0_39], %59 {strides = array<i32>} : memref<8x1xf32, #tpu.memory_space<vmem>>, vector<8x1xf32>,
    return
  }
  func.func @transform_0(%arg0: i32) -> (i32, i32) {
    %c0_i32 = arith.constant 0 : i32
    %c0_i32_0 = arith.constant 0 : i32
    return %arg0, %c0_i32 : i32, i32
  }
  func.func @transform_1(%arg0: i32) -> (i32, i32, i32) {
    %c0_i32 = arith.constant 0 : i32
    %c0_i32_0 = arith.constant 0 : i32
    %c0_i32_1 = arith.constant 0 : i32
    %c0_i32_2 = arith.constant 0 : i32
    return %c0_i32, %c0_i32_0, %c0_i32_1 : i32, i32, i32
  }
  func.func @transform_2(%arg0: i32) -> (i32, i32) {
    %c0_i32 = arith.constant 0 : i32
    %c0_i32_0 = arith.constant 0 : i32
    %c0_i32_1 = arith.constant 0 : i32
    return %c0_i32, %c0_i32_0 : i32, i32
  }
  func.func @transform_3(%arg0: i32) -> (i32, i32) {
    %c0_i32 = arith.constant 0 : i32
    %c0_i32_0 = arith.constant 0 : i32
    return %arg0, %c0_i32 : i32, i32
  }
}

</mosaic_0001>

<llo_original>
// kernel: net_forward_packed.1
$region0: #{net_forward_packed.1}
  #allocation0 [shape = 'u32[]', space=smem, size = 0x4, offset = 0x4, fixed_abs, tag = 'smem constant byte address 0x4 - core index']
  #allocation1 [shape = 'u32[144,128]{1,0:T(1,128)}', space=vmem, size = 0x12000, scoped, tag = 'internal scratch']
  %s0 = inlined_call_operand.vmem [shape: f32[8,2], index: 0, kind: input, shape index: {}]
  %s1 = inlined_call_operand.hbm [shape: f32[6,128,128], index: 1, kind: input, shape index: {}]
  %s2 = inlined_call_operand.vmem [shape: f32[8,128], index: 2, kind: input, shape index: {}]
  %s3 = inlined_call_operand.vmem [shape: f32[8,1], index: 3, kind: output, shape index: {}]
  %s4 = sld [smem:[#allocation0]]
  $region26: #{net_forward_packed.1} parent=0
    _
  %s6 = ssub.s32 1, %s4
  %s7 = scalar_select 0, %s6, %s4
  $region1: #{net_forward_packed.1} parent=0
    #allocation2 [shape = 'u8[393216]{0}', space=vmem, size = 0x60000, scoped, tag = 'input window, operand 1, single buffered']
    #allocation3 [shape = 's32[1]{0}', space=sflag, size = 0x4, scoped, tag = 'scoped memory for net_forward_packed.1']
    %8 = vsyncpa [#allocation3], 0
    // Predicated region
    $region2: #{net_forward_packed.1} parent=1 // pred_check
      _
    $region3: #{net_forward_packed.1} parent=1 // pred_check_branch
      %10 = sbr.rel (0) target = $region5
    $region4: #{net_forward_packed.1} parent=1 // pred_region
      _
    $region5: #{net_forward_packed.1} parent=1 // pred_fallthru
      _
    // Predicated region
    $region6: #{net_forward_packed.1} parent=1 // pred_check
      _
    $region7: #{net_forward_packed.1} parent=1 // pred_check_branch
      %12 = sbr.rel (0) target = $region9
    $region8: #{net_forward_packed.1} parent=1 // pred_region
      %s14 = ssub.s32 12288, 12288
      %15 = vsyncadd [#allocation3], %s14
      %s16 = sshll.u32 [#allocation2], 4
      %s17 = int_to_ptr.vmem [resolvable:$true] %s16
      %22 = dma.hbm_to_vmem [thread:$0]  %s1, 12288, %s17, [#allocation3], 128, 128, 8
    $region9: #{net_forward_packed.1} parent=1 // pred_fallthru
      _
    // Predicated region
    $region10: #{net_forward_packed.1} parent=1 // pred_check
      _
    $region11: #{net_forward_packed.1} parent=1 // pred_check_branch
      %24 = sbr.rel (0) target = $region13
    $region12: #{net_forward_packed.1} parent=1 // pred_region
      _
    $region13: #{net_forward_packed.1} parent=1 // pred_fallthru
      _
    // Predicated region
    $region14: #{net_forward_packed.1} parent=1 // pred_check
      _
    $region15: #{net_forward_packed.1} parent=1 // pred_check_branch
      %26 = sbr.rel (0) target = $region17
    $region16: #{net_forward_packed.1} parent=1 // pred_region
      %27 = dma.done [#allocation3], 12288
    $region17: #{net_forward_packed.1} parent=1 // pred_fallthru
      _
    %v28 = vld [vmem:[%s0] sm:$0xff]
    %v29 = vld [vmem:[#allocation2] sm:$0x1]
    %31 = vset.pattern.permute.xlu0 0
    %32 = vperm.xlu0 %31, %v28
    %v33 = vpop.permute.xlu0 %32
    %v35 = vlaneseq
    %v36 = vshrl.u32 %v35, 7
    %v37 = vsub.s32 0, %v36
    %v38 = vrot.slane %v29, %v37
    %v39 = vmul.f32 %v33, %v38
    %v40 = vld [vmem:[#allocation2 + $0x1] sm:$0x1]
    %41 = vset.pattern.permute.xlu0 1
    %42 = vperm.xlu0 %41, %v28
    %v43 = vpop.permute.xlu0 %42
    %v45 = vlaneseq
    %v46 = vshrl.u32 %v45, 7
    %v47 = vsub.s32 0, %v46
    %v48 = vrot.slane %v40, %v47
    %v49 = vmul.f32 %v43, %v48
    %v50 = vadd.f32 %v39, %v49
    %v51 = vld [vmem:[%s2] sm:$0x1]
    %v52 = vlaneseq
    %v53 = vshrl.u32 %v52, 7
    %v54 = vsub.s32 0, %v53
    %v55 = vrot.slane %v51, %v54
    %v56 = vadd.f32 %v50, %v55
    %v57 = vmax.f32 %v56, 0.0
    %s58 = scalar_lea.vmem [#allocation2], 128
    %v59 = vld [vmem:[%s58] sm:$0xff]
    %v60 = vld [vmem:[%s58 + $0x8] sm:$0xff]
    %v61 = vld [vmem:[%s58 + $0x10] sm:$0xff]
    %v62 = vld [vmem:[%s58 + $0x18] sm:$0xff]
    %v63 = vld [vmem:[%s58 + $0x20] sm:$0xff]
    %v64 = vld [vmem:[%s58 + $0x28] sm:$0xff]
    %v65 = vld [vmem:[%s58 + $0x30] sm:$0xff]
    %v66 = vld [vmem:[%s58 + $0x38] sm:$0xff]
    %v67 = vld [vmem:[%s58 + $0x40] sm:$0xff]
    %v68 = vld [vmem:[%s58 + $0x48] sm:$0xff]
    %v69 = vld [vmem:[%s58 + $0x50] sm:$0xff]
    %v70 = vld [vmem:[%s58 + $0x58] sm:$0xff]
    %v71 = vld [vmem:[%s58 + $0x60] sm:$0xff]
    %v72 = vld [vmem:[%s58 + $0x68] sm:$0xff]
    %v73 = vld [vmem:[%s58 + $0x70] sm:$0xff]
    %v74 = vld [vmem:[%s58 + $0x78] sm:$0xff]
    %v75 = vld [vmem:[%s2 + $0x1] sm:$0x1]
    %v76 = vlaneseq
    %v77 = vshrl.u32 %v76, 7
    %v78 = vsub.s32 0, %v77
    %v79 = vrot.slane %v75, %v78
    %80 = vmatprep.subr.mxu0 0.0
    %81 = vmatpush1.msra.mxu0 %v74
    %82 = vmatprep.subr.mxu0 0.0
    %83 = vmatpush1.msra.mxu0 %v73
    %84 = vmatprep.subr.mxu0 0.0
    %85 = vmatpush1.msra.mxu0 %v72
    %86 = vmatprep.subr.mxu0 0.0
    %87 = vmatpush1.msra.mxu0 %v71
    %88 = vmatprep.subr.mxu0 0.0
    %89 = vmatpush1.msra.mxu0 %v70
    %90 = vmatprep.subr.mxu0 0.0
    %91 = vmatpush1.msra.mxu0 %v69
    %92 = vmatprep.subr.mxu0 0.0
    %93 = vmatpush1.msra.mxu0 %v68
    %94 = vmatprep.subr.mxu0 0.0
    %95 = vmatpush1.msra.mxu0 %v67
    %96 = vmatprep.subr.mxu0 0.0
    %97 = vmatpush1.msra.mxu0 %v66
    %98 = vmatprep.subr.mxu0 0.0
    %99 = vmatpush1.msra.mxu0 %v65
    %100 = vmatprep.subr.mxu0 0.0
    %101 = vmatpush1.msra.mxu0 %v64
    %102 = vmatprep.subr.mxu0 0.0
    %103 = vmatpush1.msra.mxu0 %v63
    %104 = vmatprep.subr.mxu0 0.0
    %105 = vmatpush1.msra.mxu0 %v62
    %106 = vmatprep.subr.mxu0 0.0
    %107 = vmatpush1.msra.mxu0 %v61
    %108 = vmatprep.subr.mxu0 0.0
    %109 = vmatpush1.msra.mxu0 %v60
    %110 = vmatprep.subr.mxu0 0.0
    %111 = vmatpush1.msra.mxu0 %v59
    %112 = vmatprep.subr.mxu0 0.0
    %113 = vmatpush2.msra.mxu0 0.0
    %114 = vmatprep.subr.mxu0 0.0
    %115 = vmatpush2.msra.mxu0 0.0
    %116 = vmatprep.subr.mxu0 0.0
    %117 = vmatpush2.msra.mxu0 0.0
    %118 = vmatprep.subr.mxu0 0.0
    %119 = vmatpush2.msra.mxu0 0.0
    %120 = vmatprep.subr.mxu0 0.0
    %121 = vmatpush2.msra.mxu0 0.0
    %122 = vmatprep.subr.mxu0 0.0
    %123 = vmatpush2.msra.mxu0 0.0
    %124 = vmatprep.subr.mxu0 0.0
    %125 = vmatpush2.msra.mxu0 0.0
    %126 = vmatprep.subr.mxu0 0.0
    %127 = vmatpush2.msra.mxu0 0.0
    %128 = vmatprep.subr.mxu0 0.0
    %129 = vmatpush2.msra.mxu0 0.0
    %130 = vmatprep.subr.mxu0 0.0
    %131 = vmatpush2.msra.mxu0 0.0
    %132 = vmatprep.subr.mxu0 0.0
    %133 = vmatpush2.msra.mxu0 0.0
    %134 = vmatprep.subr.mxu0 0.0
    %135 = vmatpush2.msra.mxu0 0.0
    %136 = vmatprep.subr.mxu0 0.0
    %137 = vmatpush2.msra.mxu0 0.0
    %138 = vmatprep.subr.mxu0 0.0
    %139 = vmatpush2.msra.mxu0 0.0
    %140 = vmatprep.subr.mxu0 0.0
    %141 = vmatpush2.msra.mxu0 0.0
    %142 = vmatprep.subr.mxu0 0.0
    %143 = vmatpush2.msra.mxu0 0.0
    %144 = vmatprep.mubr.f32.mxu0 0.0
    %145 = vmatmul.mubr.f32.gmra.mxu0 %v57
    %v146 = vpop.f32.mrf.mxu0
    %v147 = vadd.f32 %v79, %v146
    %v148 = vpop.f32.mrf.mxu0
    %149 = vdwg.mxu0
    %v150 = vmax.f32 %v147, 0.0
    %s151 = scalar_lea.vmem [#allocation2], 256
    %v152 = vld [vmem:[%s151] sm:$0xff]
    %v153 = vld [vmem:[%s151 + $0x8] sm:$0xff]
    %v154 = vld [vmem:[%s151 + $0x10] sm:$0xff]
    %v155 = vld [vmem:[%s151 + $0x18] sm:$0xff]
    %v156 = vld [vmem:[%s151 + $0x20] sm:$0xff]
    %v157 = vld [vmem:[%s151 + $0x28] sm:$0xff]
    %v158 = vld [vmem:[%s151 + $0x30] sm:$0xff]
    %v159 = vld [vmem:[%s151 + $0x38] sm:$0xff]
    %v160 = vld [vmem:[%s151 + $0x40] sm:$0xff]
    %v161 = vld [vmem:[%s151 + $0x48] sm:$0xff]
    %v162 = vld [vmem:[%s151 + $0x50] sm:$0xff]
    %v163 = vld [vmem:[%s151 + $0x58] sm:$0xff]
    %v164 = vld [vmem:[%s151 + $0x60] sm:$0xff]
    %v165 = vld [vmem:[%s151 + $0x68] sm:$0xff]
    %v166 = vld [vmem:[%s151 + $0x70] sm:$0xff]
    %v167 = vld [vmem:[%s151 + $0x78] sm:$0xff]
    %v168 = vld [vmem:[%s2 + $0x2] sm:$0x1]
    %v169 = vlaneseq
    %v170 = vshrl.u32 %v169, 7
    %v171 = vsub.s32 0, %v170
    %v172 = vrot.slane %v168, %v171
    %173 = vmatprep.subr.mxu0 0.0
    %174 = vmatpush1.msra.mxu0 %v167
    %175 = vmatprep.subr.mxu0 0.0
    %176 = vmatpush1.msra.mxu0 %v166
    %177 = vmatprep.subr.mxu0 0.0
    %178 = vmatpush1.msra.mxu0 %v165
    %179 = vmatprep.subr.mxu0 0.0
    %180 = vmatpush1.msra.mxu0 %v164
    %181 = vmatprep.subr.mxu0 0.0
    %182 = vmatpush1.msra.mxu0 %v163
    %183 = vmatprep.subr.mxu0 0.0
    %184 = vmatpush1.msra.mxu0 %v162
    %185 = vmatprep.subr.mxu0 0.0
    %186 = vmatpush1.msra.mxu0 %v161
    %187 = vmatprep.subr.mxu0 0.0
    %188 = vmatpush1.msra.mxu0 %v160
    %189 = vmatprep.subr.mxu0 0.0
    %190 = vmatpush1.msra.mxu0 %v159
    %191 = vmatprep.subr.mxu0 0.0
    %192 = vmatpush1.msra.mxu0 %v158
    %193 = vmatprep.subr.mxu0 0.0
    %194 = vmatpush1.msra.mxu0 %v157
    %195 = vmatprep.subr.mxu0 0.0
    %196 = vmatpush1.msra.mxu0 %v156
    %197 = vmatprep.subr.mxu0 0.0
    %198 = vmatpush1.msra.mxu0 %v155
    %199 = vmatprep.subr.mxu0 0.0
    %200 = vmatpush1.msra.mxu0 %v154
    %201 = vmatprep.subr.mxu0 0.0
    %202 = vmatpush1.msra.mxu0 %v153
    %203 = vmatprep.subr.mxu0 0.0
    %204 = vmatpush1.msra.mxu0 %v152
    %205 = vmatprep.subr.mxu0 0.0
    %206 = vmatpush2.msra.mxu0 0.0
    %207 = vmatprep.subr.mxu0 0.0
    %208 = vmatpush2.msra.mxu0 0.0
    %209 = vmatprep.subr.mxu0 0.0
    %210 = vmatpush2.msra.mxu0 0.0
    %211 = vmatprep.subr.mxu0 0.0
    %212 = vmatpush2.msra.mxu0 0.0
    %213 = vmatprep.subr.mxu0 0.0
    %214 = vmatpush2.msra.mxu0 0.0
    %215 = vmatprep.subr.mxu0 0.0
    %216 = vmatpush2.msra.mxu0 0.0
    %217 = vmatprep.subr.mxu0 0.0
    %218 = vmatpush2.msra.mxu0 0.0
    %219 = vmatprep.subr.mxu0 0.0
    %220 = vmatpush2.msra.mxu0 0.0
    %221 = vmatprep.subr.mxu0 0.0
    %222 = vmatpush2.msra.mxu0 0.0
    %223 = vmatprep.subr.mxu0 0.0
    %224 = vmatpush2.msra.mxu0 0.0
    %225 = vmatprep.subr.mxu0 0.0
    %226 = vmatpush2.msra.mxu0 0.0
    %227 = vmatprep.subr.mxu0 0.0
    %228 = vmatpush2.msra.mxu0 0.0
    %229 = vmatprep.subr.mxu0 0.0
    %230 = vmatpush2.msra.mxu0 0.0
    %231 = vmatprep.subr.mxu0 0.0
    %232 = vmatpush2.msra.mxu0 0.0
    %233 = vmatprep.subr.mxu0 0.0
    %234 = vmatpush2.msra.mxu0 0.0
    %235 = vmatprep.subr.mxu0 0.0
    %236 = vmatpush2.msra.mxu0 0.0
    %237 = vmatprep.mubr.f32.mxu0 0.0
    %238 = vmatmul.mubr.f32.gmra.mxu0 %v150
    %v239 = vpop.f32.mrf.mxu0
    %v240 = vadd.f32 %v172, %v239
    %v241 = vpop.f32.mrf.mxu0
    %242 = vdwg.mxu0
    %v243 = vmax.f32 %v240, 0.0
    %s244 = scalar_lea.vmem [#allocation2], 384
    %v245 = vld [vmem:[%s244] sm:$0xff]
    %v246 = vld [vmem:[%s244 + $0x8] sm:$0xff]
    %v247 = vld [vmem:[%s244 + $0x10] sm:$0xff]
    %v248 = vld [vmem:[%s244 + $0x18] sm:$0xff]
    %v249 = vld [vmem:[%s244 + $0x20] sm:$0xff]
    %v250 = vld [vmem:[%s244 + $0x28] sm:$0xff]
    %v251 = vld [vmem:[%s244 + $0x30] sm:$0xff]
    %v252 = vld [vmem:[%s244 + $0x38] sm:$0xff]
    %v253 = vld [vmem:[%s244 + $0x40] sm:$0xff]
    %v254 = vld [vmem:[%s244 + $0x48] sm:$0xff]
    %v255 = vld [vmem:[%s244 + $0x50] sm:$0xff]
    %v256 = vld [vmem:[%s244 + $0x58] sm:$0xff]
    %v257 = vld [vmem:[%s244 + $0x60] sm:$0xff]
    %v258 = vld [vmem:[%s244 + $0x68] sm:$0xff]
    %v259 = vld [vmem:[%s244 + $0x70] sm:$0xff]
    %v260 = vld [vmem:[%s244 + $0x78] sm:$0xff]
    %v261 = vld [vmem:[%s2 + $0x3] sm:$0x1]
    %v262 = vlaneseq
    %v263 = vshrl.u32 %v262, 7
    %v264 = vsub.s32 0, %v263
    %v265 = vrot.slane %v261, %v264
    %266 = vmatprep.subr.mxu0 0.0
    %267 = vmatpush1.msra.mxu0 %v260
    %268 = vmatprep.subr.mxu0 0.0
    %269 = vmatpush1.msra.mxu0 %v259
    %270 = vmatprep.subr.mxu0 0.0
    %271 = vmatpush1.msra.mxu0 %v258
    %272 = vmatprep.subr.mxu0 0.0
    %273 = vmatpush1.msra.mxu0 %v257
    %274 = vmatprep.subr.mxu0 0.0
    %275 = vmatpush1.msra.mxu0 %v256
    %276 = vmatprep.subr.mxu0 0.0
    %277 = vmatpush1.msra.mxu0 %v255
    %278 = vmatprep.subr.mxu0 0.0
    %279 = vmatpush1.msra.mxu0 %v254
    %280 = vmatprep.subr.mxu0 0.0
    %281 = vmatpush1.msra.mxu0 %v253
    %282 = vmatprep.subr.mxu0 0.0
    %283 = vmatpush1.msra.mxu0 %v252
    %284 = vmatprep.subr.mxu0 0.0
    %285 = vmatpush1.msra.mxu0 %v251
    %286 = vmatprep.subr.mxu0 0.0
    %287 = vmatpush1.msra.mxu0 %v250
    %288 = vmatprep.subr.mxu0 0.0
    %289 = vmatpush1.msra.mxu0 %v249
    %290 = vmatprep.subr.mxu0 0.0
    %291 = vmatpush1.msra.mxu0 %v248
    %292 = vmatprep.subr.mxu0 0.0
    %293 = vmatpush1.msra.mxu0 %v247
    %294 = vmatprep.subr.mxu0 0.0
    %295 = vmatpush1.msra.mxu0 %v246
    %296 = vmatprep.subr.mxu0 0.0
    %297 = vmatpush1.msra.mxu0 %v245
    %298 = vmatprep.subr.mxu0 0.0
    %299 = vmatpush2.msra.mxu0 0.0
    %300 = vmatprep.subr.mxu0 0.0
    %301 = vmatpush2.msra.mxu0 0.0
    %302 = vmatprep.subr.mxu0 0.0
    %303 = vmatpush2.msra.mxu0 0.0
    %304 = vmatprep.subr.mxu0 0.0
    %305 = vmatpush2.msra.mxu0 0.0
    %306 = vmatprep.subr.mxu0 0.0
    %307 = vmatpush2.msra.mxu0 0.0
    %308 = vmatprep.subr.mxu0 0.0
    %309 = vmatpush2.msra.mxu0 0.0
    %310 = vmatprep.subr.mxu0 0.0
    %311 = vmatpush2.msra.mxu0 0.0
    %312 = vmatprep.subr.mxu0 0.0
    %313 = vmatpush2.msra.mxu0 0.0
    %314 = vmatprep.subr.mxu0 0.0
    %315 = vmatpush2.msra.mxu0 0.0
    %316 = vmatprep.subr.mxu0 0.0
    %317 = vmatpush2.msra.mxu0 0.0
    %318 = vmatprep.subr.mxu0 0.0
    %319 = vmatpush2.msra.mxu0 0.0
    %320 = vmatprep.subr.mxu0 0.0
    %321 = vmatpush2.msra.mxu0 0.0
    %322 = vmatprep.subr.mxu0 0.0
    %323 = vmatpush2.msra.mxu0 0.0
    %324 = vmatprep.subr.mxu0 0.0
    %325 = vmatpush2.msra.mxu0 0.0
    %326 = vmatprep.subr.mxu0 0.0
    %327 = vmatpush2.msra.mxu0 0.0
    %328 = vmatprep.subr.mxu0 0.0
    %329 = vmatpush2.msra.mxu0 0.0
    %330 = vmatprep.mubr.f32.mxu0 0.0
    %331 = vmatmul.mubr.f32.gmra.mxu0 %v243
    %v332 = vpop.f32.mrf.mxu0
    %v333 = vadd.f32 %v265, %v332
    %v334 = vpop.f32.mrf.mxu0
    %335 = vdwg.mxu0
    %v336 = vmax.f32 %v333, 0.0
    %s337 = scalar_lea.vmem [#allocation2], 512
    %v338 = vld [vmem:[%s337] sm:$0xff]
    %v339 = vld [vmem:[%s337 + $0x8] sm:$0xff]
    %v340 = vld [vmem:[%s337 + $0x10] sm:$0xff]
    %v341 = vld [vmem:[%s337 + $0x18] sm:$0xff]
    %v342 = vld [vmem:[%s337 + $0x20] sm:$0xff]
    %v343 = vld [vmem:[%s337 + $0x28] sm:$0xff]
    %v344 = vld [vmem:[%s337 + $0x30] sm:$0xff]
    %v345 = vld [vmem:[%s337 + $0x38] sm:$0xff]
    %v346 = vld [vmem:[%s337 + $0x40] sm:$0xff]
    %v347 = vld [vmem:[%s337 + $0x48] sm:$0xff]
    %v348 = vld [vmem:[%s337 + $0x50] sm:$0xff]
    %v349 = vld [vmem:[%s337 + $0x58] sm:$0xff]
    %v350 = vld [vmem:[%s337 + $0x60] sm:$0xff]
    %v351 = vld [vmem:[%s337 + $0x68] sm:$0xff]
    %v352 = vld [vmem:[%s337 + $0x70] sm:$0xff]
    %v353 = vld [vmem:[%s337 + $0x78] sm:$0xff]
    %v354 = vld [vmem:[%s2 + $0x4] sm:$0x1]
    %v355 = vlaneseq
    %v356 = vshrl.u32 %v355, 7
    %v357 = vsub.s32 0, %v356
    %v358 = vrot.slane %v354, %v357
    %359 = vmatprep.subr.mxu0 0.0
    %360 = vmatpush1.msra.mxu0 %v353
    %361 = vmatprep.subr.mxu0 0.0
    %362 = vmatpush1.msra.mxu0 %v352
    %363 = vmatprep.subr.mxu0 0.0
    %364 = vmatpush1.msra.mxu0 %v351
    %365 = vmatprep.subr.mxu0 0.0
    %366 = vmatpush1.msra.mxu0 %v350
    %367 = vmatprep.subr.mxu0 0.0
    %368 = vmatpush1.msra.mxu0 %v349
    %369 = vmatprep.subr.mxu0 0.0
    %370 = vmatpush1.msra.mxu0 %v348
    %371 = vmatprep.subr.mxu0 0.0
    %372 = vmatpush1.msra.mxu0 %v347
    %373 = vmatprep.subr.mxu0 0.0
    %374 = vmatpush1.msra.mxu0 %v346
    %375 = vmatprep.subr.mxu0 0.0
    %376 = vmatpush1.msra.mxu0 %v345
    %377 = vmatprep.subr.mxu0 0.0
    %378 = vmatpush1.msra.mxu0 %v344
    %379 = vmatprep.subr.mxu0 0.0
    %380 = vmatpush1.msra.mxu0 %v343
    %381 = vmatprep.subr.mxu0 0.0
    %382 = vmatpush1.msra.mxu0 %v342
    %383 = vmatprep.subr.mxu0 0.0
    %384 = vmatpush1.msra.mxu0 %v341
    %385 = vmatprep.subr.mxu0 0.0
    %386 = vmatpush1.msra.mxu0 %v340
    %387 = vmatprep.subr.mxu0 0.0
    %388 = vmatpush1.msra.mxu0 %v339
    %389 = vmatprep.subr.mxu0 0.0
    %390 = vmatpush1.msra.mxu0 %v338
    %391 = vmatprep.subr.mxu0 0.0
    %392 = vmatpush2.msra.mxu0 0.0
    %393 = vmatprep.subr.mxu0 0.0
    %394 = vmatpush2.msra.mxu0 0.0
    %395 = vmatprep.subr.mxu0 0.0
    %396 = vmatpush2.msra.mxu0 0.0
    %397 = vmatprep.subr.mxu0 0.0
    %398 = vmatpush2.msra.mxu0 0.0
    %399 = vmatprep.subr.mxu0 0.0
    %400 = vmatpush2.msra.mxu0 0.0
    %401 = vmatprep.subr.mxu0 0.0
    %402 = vmatpush2.msra.mxu0 0.0
    %403 = vmatprep.subr.mxu0 0.0
    %404 = vmatpush2.msra.mxu0 0.0
    %405 = vmatprep.subr.mxu0 0.0
    %406 = vmatpush2.msra.mxu0 0.0
    %407 = vmatprep.subr.mxu0 0.0
    %408 = vmatpush2.msra.mxu0 0.0
    %409 = vmatprep.subr.mxu0 0.0
    %410 = vmatpush2.msra.mxu0 0.0
    %411 = vmatprep.subr.mxu0 0.0
    %412 = vmatpush2.msra.mxu0 0.0
    %413 = vmatprep.subr.mxu0 0.0
    %414 = vmatpush2.msra.mxu0 0.0
    %415 = vmatprep.subr.mxu0 0.0
    %416 = vmatpush2.msra.mxu0 0.0
    %417 = vmatprep.subr.mxu0 0.0
    %418 = vmatpush2.msra.mxu0 0.0
    %419 = vmatprep.subr.mxu0 0.0
    %420 = vmatpush2.msra.mxu0 0.0
    %421 = vmatprep.subr.mxu0 0.0
    %422 = vmatpush2.msra.mxu0 0.0
    %423 = vmatprep.mubr.f32.mxu0 0.0
    %424 = vmatmul.mubr.f32.gmra.mxu0 %v336
    %v425 = vpop.f32.mrf.mxu0
    %v426 = vadd.f32 %v358, %v425
    %v427 = vpop.f32.mrf.mxu0
    %428 = vdwg.mxu0
    %v429 = vmax.f32 %v426, 0.0
    %s430 = scalar_lea.vmem [#allocation2], 640
    %v431 = vld [vmem:[%s430] sm:$0x1]
    %v432 = vlaneseq
    %v433 = vshrl.u32 %v432, 7
    %v434 = vsub.s32 0, %v433
    %v435 = vrot.slane %v431, %v434
    %v436 = vmul.f32 %v429, %v435
    %437 = vadd.xlane.f32.xlu0 %v436
    %v438 = vpop.xlane.xlu0 %437
    %v439 = vld [vmem:[%s2 + $0x5] sm:$0x1]
    %v440 = vlaneseq
    %v441 = vshrl.u32 %v440, 7
    %v442 = vsub.s32 0, %v441
    %v443 = vrot.slane %v439, %v442
    %v444 = vadd.f32 %v438, %v443
    %vm445 = vcmask 7168
    %446 = vst.msk [vmem:[%s3] sm:$0xff] %vm445, %v444
    // Predicated region
    $region18: #{net_forward_packed.1} parent=1 // pred_check
      _
    $region19: #{net_forward_packed.1} parent=1 // pred_check_branch
      %448 = sbr.rel (0) target = $region21
    $region20: #{net_forward_packed.1} parent=1 // pred_region
      _
    $region21: #{net_forward_packed.1} parent=1 // pred_fallthru
      _
    // Predicated region
    $region22: #{net_forward_packed.1} parent=1 // pred_check
      _
    $region23: #{net_forward_packed.1} parent=1 // pred_check_branch
      %450 = sbr.rel (0) target = $region25
    $region24: #{net_forward_packed.1} parent=1 // pred_region
      _
    $region25: #{net_forward_packed.1} parent=1 // pred_fallthru
      _
    %451 = vsyncpa [#allocation3], 1

</llo_original>
